<compile_context>
chip_gen: v6e
topology: v6e:2x2x1
jax: 0.10.0
libtpu: 0.0.40
codegen_flags: <defaults>
</compile_context>

<pallas_src>
import functools

import jax
import jax.numpy as jnp
import numpy as np
from jax.experimental import pallas as pl
from jax.experimental.pallas import tpu as pltpu

LEAKY_SLOPE = 0.2
BN_EPS = 1e-5
KSIZE = 4
LANE = 128
VMEM_LIMIT = 32 * 1024 * 1024  # explicit scoped-VMEM budget, safe on v5e/v6e/v7x


def _round_up(x, m):
    return ((x + m - 1) // m) * m


def _choose_tile_m(M):
    """Row-tile for the M (= N*Ho*Wo) axis: big enough to pipeline, bounded for v7x VMEM."""
    if M >= 1024:
        return 512
    if M >= 512:
        return 256
    return max(8, _round_up(M, 8))


# ----------------------------- Pallas kernels ------------------------------ #

def _matmul_bias_act_kernel(x_ref, w_ref, b_ref, o_ref, *, slope):
    """o = x @ w + b (bf16 operands, f32 accumulate), optional fused LeakyReLU (f32)."""
    y = jnp.dot(x_ref[...], w_ref[...], preferred_element_type=jnp.float32)
    y = y + b_ref[...]
    if slope is not None:
        y = jnp.where(y >= 0.0, y, slope * y)
    o_ref[...] = y.astype(o_ref.dtype)


def _matmul_bias_stats_kernel(x_ref, w_ref, b_ref, o_ref, stats_ref):
    """Conv matmul tile + per-tile (sum, sum-of-squares) epilogue for fused BN statistics."""
    y = jnp.dot(x_ref[...], w_ref[...], preferred_element_type=jnp.float32)
    y = y + b_ref[...]
    o_ref[...] = y.astype(o_ref.dtype)
    stats_ref[:, 0:1, :] = jnp.sum(y, axis=0, keepdims=True)[None]
    stats_ref[:, 1:2, :] = jnp.sum(y * y, axis=0, keepdims=True)[None]


def _direct_conv_s1_kernel(x_ref, w_ref, b_ref, o_ref, stats_ref=None, *, Ho, Wo, slope):
    """Stride-1 4x4 conv on one padded NHWC image; no materialized im2col.

    x_ref:  [1, Hp, Wp, Cin]    bf16 (padded input, resident in VMEM)
    w_ref:  [4, 4, Cin, Coutp]  bf16
    b_ref:  [1, Coutp]          f32
    o_ref:  [1, Ho, Wo, Coutp]  f32
    stats_ref (optional): [1, 2, Coutp] per-image (sum, sum-of-squares) for BatchNorm.
    """
    coutp = o_ref.shape[-1]
    bias = b_ref[...]
    if stats_ref is not None:
        s_acc = jnp.zeros((1, coutp), jnp.float32)
        q_acc = jnp.zeros((1, coutp), jnp.float32)
    for oh in range(Ho):
        acc = jnp.zeros((Wo, coutp), jnp.float32)
        for kh in range(KSIZE):
            for kw in range(KSIZE):
                win = x_ref[0, oh + kh, kw:kw + Wo, :]          # [Wo, Cin] (from VMEM)
                acc += jnp.dot(win, w_ref[kh, kw],
                               preferred_element_type=jnp.float32)
        y = acc + bias
        if slope is not None:
            y = jnp.where(y >= 0.0, y, slope * y)
        o_ref[0, oh] = y.astype(o_ref.dtype)
        if stats_ref is not None:
            s_acc += jnp.sum(y, axis=0, keepdims=True)
            q_acc += jnp.sum(y * y, axis=0, keepdims=True)
    if stats_ref is not None:
        stats_ref[:, 0:1, :] = s_acc[None]
        stats_ref[:, 1:2, :] = q_acc[None]


def _scale_shift_lrelu_kernel(y_ref, sc_ref, sh_ref, o_ref, *, slope):
    """Per-channel BatchNorm affine (precomputed scale/shift) + LeakyReLU, tiled over M."""
    y = y_ref[...] * sc_ref[...] + sh_ref[...]
    o_ref[...] = jnp.where(y >= 0.0, y, slope * y).astype(o_ref.dtype)


# ------------------------------ JAX-side glue ------------------------------ #

def _im2col(x, stride, pad=1, k=KSIZE):
    """x: [N,H,W,C] -> ([N*Ho*Wo, k*k*C], Ho, Wo), patch element order (kh, kw, Cin)."""
    N, H, W, C = x.shape
    xp = jnp.pad(x, ((0, 0), (pad, pad), (pad, pad), (0, 0)))
    Ho = (H + 2 * pad - k) // stride + 1
    Wo = (W + 2 * pad - k) // stride + 1
    patches = []
    for i in range(k):
        for j in range(k):
            patches.append(xp[:, i:i + stride * Ho:stride, j:j + stride * Wo:stride, :])
    cols = jnp.concatenate(patches, axis=-1)  # [N, Ho, Wo, k*k*C]
    return cols.reshape(N * Ho * Wo, k * k * C), Ho, Wo


def conv_im2col_pallas(x_nhwc, w_oihw, b, *, stride, fuse_slope=None, emit_stats=False):
    """Strided Conv2d(k=4, pad=1) via im2col + M-tiled Pallas MXU matmul (bf16 operands)."""
    N = x_nhwc.shape[0]
    Cout = w_oihw.shape[0]
    cols, Ho, Wo = _im2col(x_nhwc.astype(jnp.bfloat16), stride)
    M, K = cols.shape
    Kp = _round_up(K, LANE)            # lane-dense K
    Coutp = _round_up(Cout, LANE)      # lane-dense output (no masked vst)
    TM = _choose_tile_m(M)
    Mp = _round_up(M, TM)
    n_tiles = Mp // TM

    cols = jnp.pad(cols, ((0, Mp - M), (0, Kp - K)))
    # OIHW -> (kh, kw, Cin, Cout) -> [k*k*Cin, Cout], matching im2col element order.
    w_mat = jnp.transpose(w_oihw, (2, 3, 1, 0)).reshape(K, Cout)
    w_mat = jnp.pad(w_mat, ((0, Kp - K), (0, Coutp - Cout))).astype(jnp.bfloat16)
    b_row = jnp.pad(b.reshape(1, Cout), ((0, 0), (0, Coutp - Cout))).astype(jnp.float32)

    in_specs = [
        pl.BlockSpec((TM, Kp), lambda i: (i, 0)),       # im2col rows: tiled over M
        pl.BlockSpec((Kp, Coutp), lambda i: (0, 0)),    # weights: resident across the grid
        pl.BlockSpec((1, Coutp), lambda i: (0, 0)),     # bias: resident, f32
    ]
    cparams = pltpu.CompilerParams(dimension_semantics=("parallel",),
                                   vmem_limit_bytes=VMEM_LIMIT)

    if emit_stats:
        y, stats = pl.pallas_call(
            _matmul_bias_stats_kernel,
            grid=(n_tiles,),
            in_specs=in_specs,
            out_specs=(pl.BlockSpec((TM, Coutp), lambda i: (i, 0)),
                       pl.BlockSpec((1, 2, Coutp), lambda i: (i, 0, 0))),
            out_shape=(jax.ShapeDtypeStruct((Mp, Coutp), jnp.float32),
                       jax.ShapeDtypeStruct((n_tiles, 2, Coutp), jnp.float32)),
            compiler_params=cparams,
        )(cols, w_mat, b_row)
        tot = jnp.sum(stats, axis=0)                     # [2, Coutp] (tiny host-side reduce)
        n_pad = Mp - M                                   # zero-padded rows contribute exactly `bias`
        s = tot[0, :Cout] - n_pad * b_row[0, :Cout]
        q = tot[1, :Cout] - n_pad * b_row[0, :Cout] ** 2
        y = y[:M, :Cout].reshape(N, Ho, Wo, Cout)
        return y, (s, q, M)

    y = pl.pallas_call(
        functools.partial(_matmul_bias_act_kernel, slope=fuse_slope),
        grid=(n_tiles,),
        in_specs=in_specs,
        out_specs=pl.BlockSpec((TM, Coutp), lambda i: (i, 0)),
        out_shape=jax.ShapeDtypeStruct((Mp, Coutp), jnp.float32),
        compiler_params=cparams,
    )(cols, w_mat, b_row)
    return y[:M, :Cout].reshape(N, Ho, Wo, Cout)


def conv_direct_s1_pallas(x_nhwc, w_oihw, b, *, fuse_slope=None, emit_stats=False):
    """Stride-1 Conv2d(k=4, pad=1) with no materialized im2col (16x HBM traffic saved)."""
    N, H, W, Cin = x_nhwc.shape
    Cout = w_oihw.shape[0]
    Coutp = _round_up(Cout, LANE)                        # Cout=1 final layer -> lane-dense 128
    Hp, Wp = H + 2, W + 2
    Ho, Wo = Hp - KSIZE + 1, Wp - KSIZE + 1

    xp = jnp.pad(x_nhwc, ((0, 0), (1, 1), (1, 1), (0, 0))).astype(jnp.bfloat16)
    w_k = jnp.transpose(w_oihw, (2, 3, 1, 0))            # (kh, kw, Cin, Cout)
    w_k = jnp.pad(w_k, ((0, 0), (0, 0), (0, 0), (0, Coutp - Cout))).astype(jnp.bfloat16)
    b_row = jnp.pad(b.reshape(1, Cout), ((0, 0), (0, Coutp - Cout))).astype(jnp.float32)

    in_specs = [
        pl.BlockSpec((1, Hp, Wp, Cin), lambda n: (n, 0, 0, 0)),
        pl.BlockSpec((KSIZE, KSIZE, Cin, Coutp), lambda n: (0, 0, 0, 0)),   # resident
        pl.BlockSpec((1, Coutp), lambda n: (0, 0)),                          # resident
    ]
    out_specs = [pl.BlockSpec((1, Ho, Wo, Coutp), lambda n: (n, 0, 0, 0))]
    out_shape = [jax.ShapeDtypeStruct((N, Ho, Wo, Coutp), jnp.float32)]
    if emit_stats:
        out_specs.append(pl.BlockSpec((1, 2, Coutp), lambda n: (n, 0, 0)))
        out_shape.append(jax.ShapeDtypeStruct((N, 2, Coutp), jnp.float32))

    res = pl.pallas_call(
        functools.partial(_direct_conv_s1_kernel, Ho=Ho, Wo=Wo, slope=fuse_slope),
        grid=(N,),
        in_specs=in_specs,
        out_specs=tuple(out_specs) if emit_stats else out_specs[0],
        out_shape=tuple(out_shape) if emit_stats else out_shape[0],
        compiler_params=pltpu.CompilerParams(dimension_semantics=("parallel",),
                                             vmem_limit_bytes=VMEM_LIMIT),
    )(xp, w_k, b_row)

    if emit_stats:
        y, stats = res
        tot = jnp.sum(stats, axis=0)
        return y[..., :Cout], (tot[0, :Cout], tot[1, :Cout], N * Ho * Wo)
    return res[..., :Cout]


def batchnorm_lrelu_pallas(x_nhwc, stats, gamma, beta, *, slope=LEAKY_SLOPE, eps=BN_EPS):
    """BatchNorm (training-mode batch stats gathered in the conv epilogue) + LeakyReLU."""
    s, q, count = stats
    N, H, W, C = x_nhwc.shape
    mean = s / count
    var = q / count - mean * mean                        # biased variance (PyTorch fwd)
    inv = jax.lax.rsqrt(var + eps)
    scale = (gamma * inv).reshape(1, C).astype(jnp.float32)
    shift = (beta - mean * gamma * inv).reshape(1, C).astype(jnp.float32)

    M = N * H * W
    TM = _choose_tile_m(M)
    Mp = _round_up(M, TM)
    y = jnp.pad(x_nhwc.reshape(M, C), ((0, Mp - M), (0, 0)))
    out = pl.pallas_call(
        functools.partial(_scale_shift_lrelu_kernel, slope=slope),
        grid=(Mp // TM,),
        in_specs=[pl.BlockSpec((TM, C), lambda i: (i, 0)),
                  pl.BlockSpec((1, C), lambda i: (0, 0)),
                  pl.BlockSpec((1, C), lambda i: (0, 0))],
        out_specs=pl.BlockSpec((TM, C), lambda i: (i, 0)),
        out_shape=jax.ShapeDtypeStruct((Mp, C), jnp.float32),
        compiler_params=pltpu.CompilerParams(dimension_semantics=("parallel",),
                                             vmem_limit_bytes=VMEM_LIMIT),
    )(y, scale, shift)
    return out[:M].reshape(N, H, W, C)


# ----------------------------- Model definition ----------------------------- #

def init_params(key, in_channels):
    """Deterministic parameters, PyTorch-like uniform(-1/sqrt(fan_in), 1/sqrt(fan_in)) init."""
    layer_defs = [
        (in_channels, 64, 2, False),   # block 1 (no BatchNorm)
        (64, 128, 2, True),            # block 2
        (128, 256, 2, True),           # block 3
        (256, 512, 1, True),           # block 4
        (512, 1, 1, False),            # final conv (no BN, no activation)
    ]
    params = []
    for cin, cout, stride, norm in layer_defs:
        key, wk, bk = jax.random.split(key, 3)
        fan_in = cin * KSIZE * KSIZE
        bound = 1.0 / float(np.sqrt(fan_in))
        w = jax.random.uniform(wk, (cout, cin, KSIZE, KSIZE), jnp.float32, -bound, bound)
        b = jax.random.uniform(bk, (cout,), jnp.float32, -bound, bound)
        p = dict(w=w, b=b, stride=stride, norm=norm)
        if norm:
            p["gamma"] = jnp.ones((cout,), jnp.float32)
            p["beta"] = jnp.zeros((cout,), jnp.float32)
        params.append(p)
    return params


def discriminator_forward(params, img_A, img_B):
    x = jnp.concatenate([img_A, img_B], axis=1)          # torch.cat((img_A, img_B), 1)
    x = jnp.transpose(x, (0, 2, 3, 1))                   # NCHW -> NHWC
    # Block 1: Conv(stride 2) + LeakyReLU fused into the matmul epilogue.
    p = params[0]
    x = conv_im2col_pallas(x, p["w"], p["b"], stride=p["stride"], fuse_slope=LEAKY_SLOPE)
    # Blocks 2-3: Conv(stride 2) with fused BN-stats epilogue, then tiled BN+LeakyReLU pass.
    for p in params[1:3]:
        x, st = conv_im2col_pallas(x, p["w"], p["b"], stride=p["stride"], emit_stats=True)
        x = batchnorm_lrelu_pallas(x, st, p["gamma"], p["beta"])
    # Block 4: stride-1 conv without materialized im2col, fused BN-stats.
    p = params[3]
    x, st = conv_direct_s1_pallas(x, p["w"], p["b"], emit_stats=True)
    x = batchnorm_lrelu_pallas(x, st, p["gamma"], p["beta"])
    # Final stride-1 conv (Cout=1, padded to a lane-dense 128 inside the kernel).
    p = params[4]
    x = conv_direct_s1_pallas(x, p["w"], p["b"])
    return jnp.transpose(x, (0, 3, 1, 2))                # NHWC -> NCHW


# --------------------------- Pure-JAX reference ----------------------------- #

def reference_forward(params, img_A, img_B):
    x = jnp.concatenate([img_A, img_B], axis=1)

    def conv(x, w, b, stride):
        y = jax.lax.conv_general_dilated(
            x, w, window_strides=(stride, stride), padding=((1, 1), (1, 1)),
            dimension_numbers=("NCHW", "OIHW", "NCHW"))
        return y + b[None, :, None, None]

    def bn_lrelu(x, gamma, beta):
        mean = jnp.mean(x, axis=(0, 2, 3), keepdims=True)
        var = jnp.mean((x - mean) ** 2, axis=(0, 2, 3), keepdims=True)
        y = (x - mean) * jax.lax.rsqrt(var + BN_EPS)
        y = y * gamma[None, :, None, None] + beta[None, :, None, None]
        return jnp.where(y >= 0, y, LEAKY_SLOPE * y)

    p = params[0]
    x = conv(x, p["w"], p["b"], p["stride"])
    x = jnp.where(x >= 0, x, LEAKY_SLOPE * x)
    for p in params[1:4]:
        x = conv(x, p["w"], p["b"], p["stride"])
        x = bn_lrelu(x, p["gamma"], p["beta"])
    p = params[4]
    return conv(x, p["w"], p["b"], p["stride"])


# ----------------------------------- Main ----------------------------------- #

if __name__ == "__main__":
    key = jax.random.PRNGKey(0)
    pkey, akey, bkey = jax.random.split(key, 3)

    # img_A, img_B each have 2 channels -> concatenated in_channels = 4.
    # 32x32 is the smallest spatial size that survives 3 stride-2 + 2 stride-1 4x4 convs.
    in_channels = 4
    img_A = jax.random.normal(akey, (2, 2, 32, 32), jnp.float32)
    img_B = jax.random.normal(bkey, (2, 2, 32, 32), jnp.float32)

    params = init_params(pkey, in_channels)

    out = jax.block_until_ready(discriminator_forward(params, img_A, img_B))
    assert out.shape == (2, 1, 2, 2), out.shape

    ref = jax.block_until_ready(reference_forward(params, img_A, img_B))
    # bf16 MXU operands (f32 accumulate) -> slightly looser tolerance than pure f32.
    np.testing.assert_allclose(np.asarray(out), np.asarray(ref), rtol=1e-1, atol=5e-2)

    print("KERNEL_OK")
</pallas_src>

<mosaic_0001>
module attributes {stable_mosaic.version = 11 : i64} {
  func.func @_matmul_bias_act_kernel(%arg0: i32, %arg1: memref<256x128xbf16, #tpu.memory_space<vmem>>, %arg2: memref<128x128xbf16, #tpu.memory_space<vmem>>, %arg3: memref<1x128xf32, #tpu.memory_space<vmem>>, %arg4: memref<256x128xf32, #tpu.memory_space<vmem>>) attributes {dimension_semantics = [#tpu.dimension_semantics<parallel>], iteration_bounds = array<i64: 2>, scalar_prefetch = 0 : i64, scratch_operands = 0 : i64, tpu.core_type = #tpu.core_type<tc>, window_params = [{transform_indices = @transform_0, window_bounds = array<i64: 256, 128>}, {pipeline_mode = #tpu.pipeline_mode<synchronous>, transform_indices = @transform_1, window_bounds = array<i64: 128, 128>}, {pipeline_mode = #tpu.pipeline_mode<synchronous>, transform_indices = @transform_2, window_bounds = array<i64: 1, 128>}, {transform_indices = @transform_3, window_bounds = array<i64: 256, 128>}]} {
    %c0 = arith.constant 0 : index
    %c0_0 = arith.constant 0 : index
    %0 = vector.load %arg1[%c0, %c0_0] : memref<256x128xbf16, #tpu.memory_space<vmem>>, vector<256x128xbf16>
    %c0_1 = arith.constant 0 : index
    %c0_2 = arith.constant 0 : index
    %1 = vector.load %arg2[%c0_1, %c0_2] : memref<128x128xbf16, #tpu.memory_space<vmem>>, vector<128x128xbf16>
    %cst = arith.constant dense<0.000000e+00> : vector<256x128xf32>
    %2 = tpu.matmul %0, %1, %cst {dimension_numbers = #tpu.dot_dimension_numbers<[1], [0], [0], [1], [0, 0, 1, 1], [], []>} : vector<256x128xbf16>, vector<128x128xbf16>, vector<256x128xf32> -> vector<256x128xf32>
    %c0_3 = arith.constant 0 : index
    %c0_4 = arith.constant 0 : index
    %3 = vector.load %arg3[%c0_3, %c0_4] : memref<1x128xf32, #tpu.memory_space<vmem>>, vector<1x128xf32>
    %4 = vector.broadcast %3 : vector<1x128xf32> to vector<256x128xf32>
    %5 = arith.addf %2, %4 : vector<256x128xf32>
    %cst_5 = arith.constant 0.000000e+00 : f32
    %6 = vector.broadcast %cst_5 : f32 to vector<256x128xf32>
    %7 = arith.cmpf oge, %5, %6 : vector<256x128xf32>
    %cst_6 = arith.constant 2.000000e-01 : f32
    %8 = vector.broadcast %cst_6 : f32 to vector<256x128xf32>
    %9 = arith.mulf %8, %5 : vector<256x128xf32>
    %10 = arith.select %7, %5, %9 : vector<256x128xi1>, vector<256x128xf32>
    %c0_7 = arith.constant 0 : index
    %c0_8 = arith.constant 0 : index
    %11 = vector.load %arg4[%c0_7, %c0_8] : memref<256x128xf32, #tpu.memory_space<vmem>>, vector<256x128xf32>
    tpu.vector_store %arg4[%c0_7, %c0_8], %10 {strides = array<i32>} : memref<256x128xf32, #tpu.memory_space<vmem>>, vector<256x128xf32>,
    return
  }
  func.func @transform_0(%arg0: i32) -> (i32, i32) {
    %c0_i32 = arith.constant 0 : i32
    %c0_i32_0 = arith.constant 0 : i32
    return %arg0, %c0_i32 : i32, i32
  }
  func.func @transform_1(%arg0: i32) -> (i32, i32) {
    %c0_i32 = arith.constant 0 : i32
    %c0_i32_0 = arith.constant 0 : i32
    %c0_i32_1 = arith.constant 0 : i32
    return %c0_i32, %c0_i32_0 : i32, i32
  }
  func.func @transform_2(%arg0: i32) -> (i32, i32) {
    %c0_i32 = arith.constant 0 : i32
    %c0_i32_0 = arith.constant 0 : i32
    %c0_i32_1 = arith.constant 0 : i32
    return %c0_i32, %c0_i32_0 : i32, i32
  }
  func.func @transform_3(%arg0: i32) -> (i32, i32) {
    %c0_i32 = arith.constant 0 : i32
    %c0_i32_0 = arith.constant 0 : i32
    return %arg0, %c0_i32 : i32, i32
  }
}

</mosaic_0001>

<llo_original>
// kernel: tpu_custom_call.1
$region0: #{tpu_custom_call.1}
  #allocation0 [shape = 'u32[]', space=smem, size = 0x4, offset = 0x4, fixed_abs, tag = 'smem constant byte address 0x4 - core index']
  #allocation1 [shape = 'u32[144,128]{1,0:T(1,128)}', space=vmem, size = 0x12000, scoped, tag = 'internal scratch']
  %s0 = inlined_call_operand.hbm [shape: bf16[512,128], index: 0, kind: input, shape index: {}]
  %s1 = inlined_call_operand.hbm [shape: bf16[128,128], index: 1, kind: input, shape index: {}]
  %s2 = inlined_call_operand.vmem [shape: f32[1,128], index: 2, kind: input, shape index: {}]
  %s3 = inlined_call_operand.hbm [shape: f32[512,128], index: 3, kind: output, shape index: {}]
  %s4 = sld [smem:[#allocation0]]
  $region53: #{tpu_custom_call.1} parent=0
    _
  %s6 = ssub.s32 1, %s4
  %s7 = scalar_select 0, %s6, %s4
  $region1: #{tpu_custom_call.1} parent=0
    #allocation2 [shape = 'u8[131072]{0}', space=vmem, size = 0x20000, scoped, tag = 'input window, operand 0']
    #allocation3 [shape = 's32[2]{0}', space=sflag, size = 0x8, scoped, tag = 'scoped memory for tpu_custom_call.1']
    #allocation4 [shape = 's32[2]{0}', space=sflag, size = 0x8, scoped, tag = 'scoped memory for tpu_custom_call.1']
    #allocation5 [shape = 'u8[32768]{0}', space=vmem, size = 0x8000, scoped, tag = 'input window, operand 1, single buffered']
    #allocation6 [shape = 's32[1]{0}', space=sflag, size = 0x4, scoped, tag = 'scoped memory for tpu_custom_call.1']
    #allocation7 [shape = 'u8[262144]{0}', space=vmem, size = 0x40000, scoped, tag = 'output window, operand 0']
    %8 = vsyncpa [#allocation3], 0
    %s9 = scalar_lea.sflag [#allocation3], 1
    %10 = vsyncpa %s9, 0
    %11 = vsyncpa [#allocation6], 0
    %12 = vsyncpa [#allocation4], 0
    %s13 = scalar_lea.sflag [#allocation4], 1
    %14 = vsyncpa %s13, 0
    loop: start=0, step=1, limit=4
    $region2: #{tpu_custom_call.1} parent=1 // loop_pre_header
      _
    $region3: #{tpu_custom_call.1} parent=1 // loop_header
      %s16 = sphi 0, %s20
      %p17 = scmp.ge.s32.totalorder %s16, 4
      %s26 = sphi 0, %s28
      %s29 = sphi 0, %s26
      %s30 = sphi 0, %s29
      %s46 = sphi 0, %s30
      %s50 = sphi 0, %s50
      %s52 = sphi 0, %s50
      %s53 = sphi 0, %s52
      %s67 = sphi 0, %s53
      %s71 = sphi 0, %s71
      %s73 = sphi 0, %s71
      %s74 = sphi 0, %s73
      %s88 = sphi 0, %s74
      %s94 = sphi 0, %s96
      %s97 = sphi 0, %s94
      %s98 = sphi 0, %s97
      %s114 = sphi 0, %s98
    $region4: #{tpu_custom_call.1} parent=1 // loop_header_branch
      %19 = sbr.rel (%p17) target = $region8
    $region5: #{tpu_custom_call.1} parent=1 // loop_body
      %s21 = ssub.s32 %s16, 1
      %s22 = ssub.s32 %s16, 2
      %s23 = sadd.s32 %s16, 1
      %s24 = ssub.s32 %s16, %s23
      %p25 = scmp.eq.s32.totalorder %s24, 0
      %s27 = sadd.s32 %s26, 1
      %s28 = scalar_select %p25, %s26, %s27
      %p31 = pneg %p25
      %p32 = scmp.eq.s32.totalorder %s16, 1
      %p33 = por %p31, %p32
      %p34 = scmp.ne.s32.totalorder %s26, %s29
      %p35 = scmp.eq.s32.totalorder %s16, 0
      %p36 = por %p34, %p35
      %p37 = scmp.ne.s32.totalorder %s26, %s29
      %p38 = scmp.eq.s32.totalorder %s21, 1
      %p39 = por %p37, %p38
      %p40 = scmp.ne.s32.totalorder %s29, %s30
      %p41 = scmp.eq.s32.totalorder %s21, 0
      %p42 = por %p40, %p41
      %p43 = scmp.ne.s32.totalorder %s29, %s30
      %p44 = scmp.eq.s32.totalorder %s22, 1
      %p45 = por %p43, %p44
      %p47 = scmp.ne.s32.totalorder %s30, %s46
      %p48 = scmp.eq.s32.totalorder %s22, 0
      %p49 = por %p47, %p48
      %s51 = sadd.s32 %s50, 1
      %p54 = scmp.eq.s32.totalorder %s16, 1
      %p55 = scmp.ne.s32.totalorder %s50, %s52
      %p56 = scmp.eq.s32.totalorder %s16, 0
      %p57 = por %p55, %p56
      %p58 = scmp.ne.s32.totalorder %s50, %s52
      %p59 = scmp.eq.s32.totalorder %s21, 1
      %p60 = por %p58, %p59
      %p61 = scmp.ne.s32.totalorder %s52, %s53
      %p62 = scmp.eq.s32.totalorder %s21, 0
      %p63 = por %p61, %p62
      %p64 = scmp.ne.s32.totalorder %s52, %s53
      %p65 = scmp.eq.s32.totalorder %s22, 1
      %p66 = por %p64, %p65
      %p68 = scmp.ne.s32.totalorder %s53, %s67
      %p69 = scmp.eq.s32.totalorder %s22, 0
      %p70 = por %p68, %p69
      %s72 = sadd.s32 %s71, 1
      %p75 = scmp.eq.s32.totalorder %s16, 1
      %p76 = scmp.ne.s32.totalorder %s71, %s73
      %p77 = scmp.eq.s32.totalorder %s16, 0
      %p78 = por %p76, %p77
      %p79 = scmp.ne.s32.totalorder %s71, %s73
      %p80 = scmp.eq.s32.totalorder %s21, 1
      %p81 = por %p79, %p80
      %p82 = scmp.ne.s32.totalorder %s73, %s74
      %p83 = scmp.eq.s32.totalorder %s21, 0
      %p84 = por %p82, %p83
      %p85 = scmp.ne.s32.totalorder %s73, %s74
      %p86 = scmp.eq.s32.totalorder %s22, 1
      %p87 = por %p85, %p86
      %p89 = scmp.ne.s32.totalorder %s74, %s88
      %p90 = scmp.eq.s32.totalorder %s22, 0
      %p91 = por %p89, %p90
      %s92 = ssub.s32 %s16, %s23
      %p93 = scmp.eq.s32.totalorder %s92, 0
      %s95 = sadd.s32 %s94, 1
      %s96 = scalar_select %p93, %s94, %s95
      %p99 = pneg %p93
      %p100 = scmp.eq.s32.totalorder %s16, 1
      %p101 = por %p99, %p100
      %p102 = scmp.ne.s32.totalorder %s94, %s97
      %p103 = scmp.eq.s32.totalorder %s16, 0
      %p104 = por %p102, %p103
      %p105 = scmp.ne.s32.totalorder %s94, %s97
      %p106 = scmp.eq.s32.totalorder %s21, 1
      %p107 = por %p105, %p106
      %p108 = scmp.ne.s32.totalorder %s97, %s98
      %p109 = scmp.eq.s32.totalorder %s21, 0
      %p110 = por %p108, %p109
      %p111 = scmp.ne.s32.totalorder %s97, %s98
      %p112 = scmp.eq.s32.totalorder %s22, 1
      %p113 = por %p111, %p112
      %p115 = scmp.ne.s32.totalorder %s98, %s114
      %p116 = scmp.eq.s32.totalorder %s22, 0
      %p117 = por %p115, %p116
      %p118 = scmp.le.s32.totalorder 1, %s16
      %p119 = scmp.lt.s32.totalorder %s16, 3
      %p120 = pnand %p118, %p119
      %p121 = pneg %p120
      // Predicated region
      $region9: #{tpu_custom_call.1} parent=5 // pred_check
        _
      $region10: #{tpu_custom_call.1} parent=5 // pred_check_branch
        %123 = sbr.rel (%p120) target = $region12
      $region11: #{tpu_custom_call.1} parent=5 // pred_region
        %s124 = ssub.s32 %s16, 1
        // Predicated region
        $region13: #{tpu_custom_call.1} parent=11 // pred_check
          %p125 = pneg %p63
        $region14: #{tpu_custom_call.1} parent=11 // pred_check_branch
          %127 = sbr.rel (%p125) target = $region16
        $region15: #{tpu_custom_call.1} parent=11 // pred_region
          %s129 = ssub.s32 1024, 1024
          %130 = vsyncadd [#allocation6], %s129
          %s131 = sshll.u32 [#allocation5], 4
          %s132 = int_to_ptr.vmem [resolvable:$true] %s131
          %137 = dma.hbm_to_vmem [thread:$0]  %s1, 1024, %s132, [#allocation6], 64, 64, 4
        $region16: #{tpu_custom_call.1} parent=11 // pred_fallthru
          _
        // Predicated region
        $region17: #{tpu_custom_call.1} parent=11 // pred_check
          %p138 = pneg %p84
        $region18: #{tpu_custom_call.1} parent=11 // pred_check_branch
          %140 = sbr.rel (%p138) target = $region20
        $region19: #{tpu_custom_call.1} parent=11 // pred_region
          _
        $region20: #{tpu_custom_call.1} parent=11 // pred_fallthru
          _
      $region12: #{tpu_custom_call.1} parent=5 // pred_fallthru
        _
      %p141 = scmp.lt.s32.totalorder %s16, 2
      // Predicated region
      $region21: #{tpu_custom_call.1} parent=5 // pred_check
        %p142 = pneg %p141
      $region22: #{tpu_custom_call.1} parent=5 // pred_check_branch
        %144 = sbr.rel (%p142) target = $region24
      $region23: #{tpu_custom_call.1} parent=5 // pred_region
        // Predicated region
        $region25: #{tpu_custom_call.1} parent=23 // pred_check
          %p145 = pneg %p36
        $region26: #{tpu_custom_call.1} parent=23 // pred_check_branch
          %147 = sbr.rel (%p145) target = $region28
        $region27: #{tpu_custom_call.1} parent=23 // pred_region
          %s148 = sand.u32 %s26, 1
          %s149 = scalar_lea.sflag [#allocation3], %s148
          %s150 = sand.u32 %s26, 1
          %s151 = smul.addr %s150, 128
          %s152 = scalar_lea.vmem [#allocation2], %s151
          %s153 = smul.u32 32, %s16
          %s155 = ssub.s32 2048, 2048
          %156 = vsyncadd %s149, %s155
          %s157 = smul.addr %s153, 64
          %s158 = scalar_lea.hbm %s0, %s157
          %s159 = sshll.u32 %s152, 4
          %s160 = int_to_ptr.vmem [resolvable:$true] %s159
          %165 = dma.hbm_to_vmem [thread:$0]  %s158, 2048, %s160, %s149, 64, 64, 4
        $region28: #{tpu_custom_call.1} parent=23 // pred_fallthru
          _
      $region24: #{tpu_custom_call.1} parent=5 // pred_fallthru
        _
      %p166 = scmp.le.s32.totalorder 1, %s16
      %p167 = scmp.lt.s32.totalorder %s16, 3
      %p168 = pnand %p166, %p167
      %p169 = pneg %p168
      // Predicated region
      $region29: #{tpu_custom_call.1} parent=5 // pred_check
        _
      $region30: #{tpu_custom_call.1} parent=5 // pred_check_branch
        %171 = sbr.rel (%p168) target = $region32
      $region31: #{tpu_custom_call.1} parent=5 // pred_region
        %s172 = ssub.s32 %s16, 1
        %s173 = sand.u32 %s29, 1
        %s174 = scalar_lea.sflag [#allocation3], %s173
        %s175 = sand.u32 %s29, 1
        %s176 = smul.addr %s175, 128
        %s177 = scalar_lea.vmem [#allocation2], %s176
        // Predicated region
        $region33: #{tpu_custom_call.1} parent=31 // pred_check
          %p178 = pneg %p42
        $region34: #{tpu_custom_call.1} parent=31 // pred_check_branch
          %180 = sbr.rel (%p178) target = $region36
        $region35: #{tpu_custom_call.1} parent=31 // pred_region
          %181 = dma.done %s174, 2048
        $region36: #{tpu_custom_call.1} parent=31 // pred_fallthru
          _
        // Predicated region
        $region37: #{tpu_custom_call.1} parent=31 // pred_check
          %p182 = pneg %p63
        $region38: #{tpu_custom_call.1} parent=31 // pred_check_branch
          %184 = sbr.rel (%p182) target = $region40
        $region39: #{tpu_custom_call.1} parent=31 // pred_region
          %185 = dma.done [#allocation6], 1024
        $region40: #{tpu_custom_call.1} parent=31 // pred_fallthru
          _
        %s186 = sand.u32 %s29, 1
        %s187 = scalar_lea.sflag [#allocation3], %s186
        %s188 = sand.u32 %s29, 1
        %s189 = smul.addr %s188, 128
        %s190 = scalar_lea.vmem [#allocation2], %s189
        %p191 = pneg %p42
        %p192 = pneg %p39
        %p193 = pneg %p63
        %p194 = pneg %p60
        %p195 = pneg %p84
        %p196 = pneg %p81
        %p197 = pneg %p110
        %p198 = pneg %p107
        %s199 = sand.u32 %s97, 1
        %s200 = scalar_lea.sflag [#allocation4], %s199
        %s201 = sand.u32 %s97, 1
        %s202 = smul.addr %s201, 256
        %s203 = scalar_lea.vmem [#allocation7], %s202
        %s204 = smul.u32 32, %s21
        %s205 = smul.u32 32, %s21
        %v207 = vld [vmem:[%s177] sm:$0xf]
        %v208 = vld [vmem:[%s177 + $0x4] sm:$0xf]
        %v209 = vld [vmem:[%s177 + $0x8] sm:$0xf]
        %v210 = vld [vmem:[%s177 + $0xc] sm:$0xf]
        %v211 = vld [vmem:[%s177 + $0x10] sm:$0xf]
        %v212 = vld [vmem:[%s177 + $0x14] sm:$0xf]
        %v213 = vld [vmem:[%s177 + $0x18] sm:$0xf]
        %v214 = vld [vmem:[%s177 + $0x1c] sm:$0xf]
        %v215 = vld [vmem:[%s177 + $0x20] sm:$0xf]
        %v216 = vld [vmem:[%s177 + $0x24] sm:$0xf]
        %v217 = vld [vmem:[%s177 + $0x28] sm:$0xf]
        %v218 = vld [vmem:[%s177 + $0x2c] sm:$0xf]
        %v219 = vld [vmem:[%s177 + $0x30] sm:$0xf]
        %v220 = vld [vmem:[%s177 + $0x34] sm:$0xf]
        %v221 = vld [vmem:[%s177 + $0x38] sm:$0xf]
        %v222 = vld [vmem:[%s177 + $0x3c] sm:$0xf]
        %v223 = vld [vmem:[%s177 + $0x40] sm:$0xf]
        %v224 = vld [vmem:[%s177 + $0x44] sm:$0xf]
        %v225 = vld [vmem:[%s177 + $0x48] sm:$0xf]
        %v226 = vld [vmem:[%s177 + $0x4c] sm:$0xf]
        %v227 = vld [vmem:[%s177 + $0x50] sm:$0xf]
        %v228 = vld [vmem:[%s177 + $0x54] sm:$0xf]
        %v229 = vld [vmem:[%s177 + $0x58] sm:$0xf]
        %v230 = vld [vmem:[%s177 + $0x5c] sm:$0xf]
        %v231 = vld [vmem:[%s177 + $0x60] sm:$0xf]
        %v232 = vld [vmem:[%s177 + $0x64] sm:$0xf]
        %v233 = vld [vmem:[%s177 + $0x68] sm:$0xf]
        %v234 = vld [vmem:[%s177 + $0x6c] sm:$0xf]
        %v235 = vld [vmem:[%s177 + $0x70] sm:$0xf]
        %v236 = vld [vmem:[%s177 + $0x74] sm:$0xf]
        %v237 = vld [vmem:[%s177 + $0x78] sm:$0xf]
        %v238 = vld [vmem:[%s177 + $0x7c] sm:$0xf]
        %v239 = vld [vmem:[#allocation5] sm:$0xf]
        %v240 = vld [vmem:[#allocation5 + $0x4] sm:$0xf]
        %v241 = vld [vmem:[#allocation5 + $0x8] sm:$0xf]
        %v242 = vld [vmem:[#allocation5 + $0xc] sm:$0xf]
        %v243 = vld [vmem:[#allocation5 + $0x10] sm:$0xf]
        %v244 = vld [vmem:[#allocation5 + $0x14] sm:$0xf]
        %v245 = vld [vmem:[#allocation5 + $0x18] sm:$0xf]
        %v246 = vld [vmem:[#allocation5 + $0x1c] sm:$0xf]
        %v247 = vld [vmem:[#allocation5 + $0x20] sm:$0xf]
        %v248 = vld [vmem:[#allocation5 + $0x24] sm:$0xf]
        %v249 = vld [vmem:[#allocation5 + $0x28] sm:$0xf]
        %v250 = vld [vmem:[#allocation5 + $0x2c] sm:$0xf]
        %v251 = vld [vmem:[#allocation5 + $0x30] sm:$0xf]
        %v252 = vld [vmem:[#allocation5 + $0x34] sm:$0xf]
        %v253 = vld [vmem:[#allocation5 + $0x38] sm:$0xf]
        %v254 = vld [vmem:[#allocation5 + $0x3c] sm:$0xf]
        %v255 = vld [vmem:[%s2] sm:$0x1]
        %v257 = vlaneseq
        %v258 = vshrl.u32 %v257, 7
        %v259 = vsub.s32 0, %v258
        %v260 = vrot.slane %v255, %v259
        %v294 = vunpack.c.l.b16 %v207
        %v295 = vunpack.c.l.b16 %v208
        %v296 = vunpack.c.l.b16 %v209
        %v297 = vunpack.c.l.b16 %v210
        %v298 = vunpack.c.l.b16 %v211
        %v299 = vunpack.c.l.b16 %v212
        %v300 = vunpack.c.l.b16 %v213
        %v301 = vunpack.c.l.b16 %v214
        %v302 = vunpack.c.l.b16 %v215
        %v303 = vunpack.c.l.b16 %v216
        %v304 = vunpack.c.l.b16 %v217
        %v305 = vunpack.c.l.b16 %v218
        %v306 = vunpack.c.l.b16 %v219
        %v307 = vunpack.c.l.b16 %v220
        %v308 = vunpack.c.l.b16 %v221
        %v309 = vunpack.c.l.b16 %v222
        %v310 = vunpack.c.l.b16 %v223
        %v311 = vunpack.c.l.b16 %v224
        %v312 = vunpack.c.l.b16 %v225
        %v313 = vunpack.c.l.b16 %v226
        %v314 = vunpack.c.l.b16 %v227
        %v315 = vunpack.c.l.b16 %v228
        %v316 = vunpack.c.l.b16 %v229
        %v317 = vunpack.c.l.b16 %v230
        %v318 = vunpack.c.l.b16 %v231
        %v319 = vunpack.c.l.b16 %v232
        %v320 = vunpack.c.l.b16 %v233
        %v321 = vunpack.c.l.b16 %v234
        %v322 = vunpack.c.l.b16 %v235
        %v323 = vunpack.c.l.b16 %v236
        %v324 = vunpack.c.l.b16 %v237
        %v325 = vunpack.c.l.b16 %v238
        %v326 = vpack.c.b16 %v295, %v294
        %v327 = vpack.c.b16 %v297, %v296
        %v328 = vpack.c.b16 %v299, %v298
        %v329 = vpack.c.b16 %v301, %v300
        %v330 = vpack.c.b16 %v303, %v302
        %v331 = vpack.c.b16 %v305, %v304
        %v332 = vpack.c.b16 %v307, %v306
        %v333 = vpack.c.b16 %v309, %v308
        %v334 = vpack.c.b16 %v311, %v310
        %v335 = vpack.c.b16 %v313, %v312
        %v336 = vpack.c.b16 %v315, %v314
        %v337 = vpack.c.b16 %v317, %v316
        %v338 = vpack.c.b16 %v319, %v318
        %v339 = vpack.c.b16 %v321, %v320
        %v340 = vpack.c.b16 %v323, %v322
        %v341 = vpack.c.b16 %v325, %v324
        %v374 = vunpack.c.l.b16 %v239
        %v375 = vunpack.c.l.b16 %v240
        %v376 = vunpack.c.l.b16 %v241
        %v377 = vunpack.c.l.b16 %v242
        %v378 = vunpack.c.l.b16 %v243
        %v379 = vunpack.c.l.b16 %v244
        %v380 = vunpack.c.l.b16 %v245
        %v381 = vunpack.c.l.b16 %v246
        %v382 = vunpack.c.l.b16 %v247
        %v383 = vunpack.c.l.b16 %v248
        %v384 = vunpack.c.l.b16 %v249
        %v385 = vunpack.c.l.b16 %v250
        %v386 = vunpack.c.l.b16 %v251
        %v387 = vunpack.c.l.b16 %v252
        %v388 = vunpack.c.l.b16 %v253
        %v389 = vunpack.c.l.b16 %v254
        %v390 = vpack.c.b16 %v375, %v374
        %v391 = vpack.c.b16 %v377, %v376
        %v392 = vpack.c.b16 %v379, %v378
        %v393 = vpack.c.b16 %v381, %v380
        %v394 = vpack.c.b16 %v383, %v382
        %v395 = vpack.c.b16 %v385, %v384
        %v396 = vpack.c.b16 %v387, %v386
        %v397 = vpack.c.b16 %v389, %v388
        %406 = vmatprep.subr.bf16.mxu0 0
        %407 = vmatpush1.bf16.msra.mxu0 %v397
        %408 = vmatprep.subr.bf16.mxu0 0
        %409 = vmatpush1.bf16.msra.mxu0 %v396
        %410 = vmatprep.subr.bf16.mxu0 0
        %411 = vmatpush1.bf16.msra.mxu0 %v395
        %412 = vmatprep.subr.bf16.mxu0 0
        %413 = vmatpush1.bf16.msra.mxu0 %v394
        %414 = vmatprep.subr.bf16.mxu0 0
        %415 = vmatpush1.bf16.msra.mxu0 %v393
        %416 = vmatprep.subr.bf16.mxu0 0
        %417 = vmatpush1.bf16.msra.mxu0 %v392
        %418 = vmatprep.subr.bf16.mxu0 0
        %419 = vmatpush1.bf16.msra.mxu0 %v391
        %420 = vmatprep.subr.bf16.mxu0 0
        %421 = vmatpush1.bf16.msra.mxu0 %v390
        %422 = vmatprep.subr.bf16.mxu0 0
        %423 = vmatpush2.bf16.msra.mxu0 0
        %424 = vmatprep.subr.bf16.mxu0 0
        %425 = vmatpush2.bf16.msra.mxu0 0
        %426 = vmatprep.subr.bf16.mxu0 0
        %427 = vmatpush2.bf16.msra.mxu0 0
        %428 = vmatprep.subr.bf16.mxu0 0
        %429 = vmatpush2.bf16.msra.mxu0 0
        %430 = vmatprep.subr.bf16.mxu0 0
        %431 = vmatpush2.bf16.msra.mxu0 0
        %432 = vmatprep.subr.bf16.mxu0 0
        %433 = vmatpush2.bf16.msra.mxu0 0
        %434 = vmatprep.subr.bf16.mxu0 0
        %435 = vmatpush2.bf16.msra.mxu0 0
        %436 = vmatprep.subr.bf16.mxu0 0
        %437 = vmatpush2.bf16.msra.mxu0 0
        %438 = vmatprep.mubr.bf16.mxu0 0
        %439 = vmatmul.mubr.bf16.gmra.mxu0 %v326
        %v440 = vpop.f32.mrf.mxu0
        %v441 = vadd.f32 %v260, %v440
        %v442 = vpop.f32.mrf.mxu0
        %v443 = vpop.f32.mrf.mxu0
        %v444 = vadd.f32 %v260, %v443
        %v445 = vpop.f32.mrf.mxu0
        %446 = vmatprep.mubr.bf16.mxu0 0
        %447 = vmatmul.mubr.bf16.gmra.mxu0 %v327
        %v448 = vpop.f32.mrf.mxu0
        %v449 = vadd.f32 %v260, %v448
        %v450 = vpop.f32.mrf.mxu0
        %v451 = vpop.f32.mrf.mxu0
        %v452 = vadd.f32 %v260, %v451
        %v453 = vpop.f32.mrf.mxu0
        %454 = vmatprep.mubr.bf16.mxu0 0
        %455 = vmatmul.mubr.bf16.gmra.mxu0 %v328
        %v456 = vpop.f32.mrf.mxu0
        %v457 = vadd.f32 %v260, %v456
        %v458 = vpop.f32.mrf.mxu0
        %v459 = vpop.f32.mrf.mxu0
        %v460 = vadd.f32 %v260, %v459
        %v461 = vpop.f32.mrf.mxu0
        %462 = vmatprep.mubr.bf16.mxu0 0
        %463 = vmatmul.mubr.bf16.gmra.mxu0 %v329
        %v464 = vpop.f32.mrf.mxu0
        %v465 = vadd.f32 %v260, %v464
        %v466 = vpop.f32.mrf.mxu0
        %v467 = vpop.f32.mrf.mxu0
        %v468 = vadd.f32 %v260, %v467
        %v469 = vpop.f32.mrf.mxu0
        %470 = vmatprep.mubr.bf16.mxu0 0
        %471 = vmatmul.mubr.bf16.gmra.mxu0 %v330
        %v472 = vpop.f32.mrf.mxu0
        %v473 = vadd.f32 %v260, %v472
        %v474 = vpop.f32.mrf.mxu0
        %v475 = vpop.f32.mrf.mxu0
        %v476 = vadd.f32 %v260, %v475
        %v477 = vpop.f32.mrf.mxu0
        %478 = vmatprep.mubr.bf16.mxu0 0
        %479 = vmatmul.mubr.bf16.gmra.mxu0 %v331
        %v480 = vpop.f32.mrf.mxu0
        %v481 = vadd.f32 %v260, %v480
        %v482 = vpop.f32.mrf.mxu0
        %v483 = vpop.f32.mrf.mxu0
        %v484 = vadd.f32 %v260, %v483
        %v485 = vpop.f32.mrf.mxu0
        %486 = vmatprep.mubr.bf16.mxu0 0
        %487 = vmatmul.mubr.bf16.gmra.mxu0 %v332
        %v488 = vpop.f32.mrf.mxu0
        %v489 = vadd.f32 %v260, %v488
        %v490 = vpop.f32.mrf.mxu0
        %v491 = vpop.f32.mrf.mxu0
        %v492 = vadd.f32 %v260, %v491
        %v493 = vpop.f32.mrf.mxu0
        %494 = vmatprep.mubr.bf16.mxu0 0
        %495 = vmatmul.mubr.bf16.gmra.mxu0 %v333
        %v496 = vpop.f32.mrf.mxu0
        %v497 = vadd.f32 %v260, %v496
        %v498 = vpop.f32.mrf.mxu0
        %v499 = vpop.f32.mrf.mxu0
        %v500 = vadd.f32 %v260, %v499
        %v501 = vpop.f32.mrf.mxu0
        %502 = vmatprep.mubr.bf16.mxu0 0
        %503 = vmatmul.mubr.bf16.gmra.mxu0 %v334
        %v504 = vpop.f32.mrf.mxu0
        %v505 = vadd.f32 %v260, %v504
        %v506 = vpop.f32.mrf.mxu0
        %v507 = vpop.f32.mrf.mxu0
        %v508 = vadd.f32 %v260, %v507
        %v509 = vpop.f32.mrf.mxu0
        %510 = vmatprep.mubr.bf16.mxu0 0
        %511 = vmatmul.mubr.bf16.gmra.mxu0 %v335
        %v512 = vpop.f32.mrf.mxu0
        %v513 = vadd.f32 %v260, %v512
        %v514 = vpop.f32.mrf.mxu0
        %v515 = vpop.f32.mrf.mxu0
        %v516 = vadd.f32 %v260, %v515
        %v517 = vpop.f32.mrf.mxu0
        %518 = vmatprep.mubr.bf16.mxu0 0
        %519 = vmatmul.mubr.bf16.gmra.mxu0 %v336
        %v520 = vpop.f32.mrf.mxu0
        %v521 = vadd.f32 %v260, %v520
        %v522 = vpop.f32.mrf.mxu0
        %v523 = vpop.f32.mrf.mxu0
        %v524 = vadd.f32 %v260, %v523
        %v525 = vpop.f32.mrf.mxu0
        %526 = vmatprep.mubr.bf16.mxu0 0
        %527 = vmatmul.mubr.bf16.gmra.mxu0 %v337
        %v528 = vpop.f32.mrf.mxu0
        %v529 = vadd.f32 %v260, %v528
        %v530 = vpop.f32.mrf.mxu0
        %v531 = vpop.f32.mrf.mxu0
        %v532 = vadd.f32 %v260, %v531
        %v533 = vpop.f32.mrf.mxu0
        %534 = vmatprep.mubr.bf16.mxu0 0
        %535 = vmatmul.mubr.bf16.gmra.mxu0 %v338
        %v536 = vpop.f32.mrf.mxu0
        %v537 = vadd.f32 %v260, %v536
        %v538 = vpop.f32.mrf.mxu0
        %v539 = vpop.f32.mrf.mxu0
        %v540 = vadd.f32 %v260, %v539
        %v541 = vpop.f32.mrf.mxu0
        %542 = vmatprep.mubr.bf16.mxu0 0
        %543 = vmatmul.mubr.bf16.gmra.mxu0 %v339
        %v544 = vpop.f32.mrf.mxu0
        %v545 = vadd.f32 %v260, %v544
        %v546 = vpop.f32.mrf.mxu0
        %v547 = vpop.f32.mrf.mxu0
        %v548 = vadd.f32 %v260, %v547
        %v549 = vpop.f32.mrf.mxu0
        %550 = vmatprep.mubr.bf16.mxu0 0
        %551 = vmatmul.mubr.bf16.gmra.mxu0 %v340
        %v552 = vpop.f32.mrf.mxu0
        %v553 = vadd.f32 %v260, %v552
        %v554 = vpop.f32.mrf.mxu0
        %v555 = vpop.f32.mrf.mxu0
        %v556 = vadd.f32 %v260, %v555
        %v557 = vpop.f32.mrf.mxu0
        %558 = vmatprep.mubr.bf16.mxu0 0
        %559 = vmatmul.mubr.bf16.gmra.mxu0 %v341
        %v560 = vpop.f32.mrf.mxu0
        %v561 = vadd.f32 %v260, %v560
        %v562 = vpop.f32.mrf.mxu0
        %v563 = vpop.f32.mrf.mxu0
        %v564 = vadd.f32 %v260, %v563
        %v565 = vpop.f32.mrf.mxu0
        %566 = vdwg.mxu0
        %vm567 = vcmp.ge.f32.partialorder %v441, 0.0
        %vm568 = vcmp.ge.f32.partialorder %v444, 0.0
        %vm569 = vcmp.ge.f32.partialorder %v449, 0.0
        %vm570 = vcmp.ge.f32.partialorder %v452, 0.0
        %vm571 = vcmp.ge.f32.partialorder %v457, 0.0
        %vm572 = vcmp.ge.f32.partialorder %v460, 0.0
        %vm573 = vcmp.ge.f32.partialorder %v465, 0.0
        %vm574 = vcmp.ge.f32.partialorder %v468, 0.0
        %vm575 = vcmp.ge.f32.partialorder %v473, 0.0
        %vm576 = vcmp.ge.f32.partialorder %v476, 0.0
        %vm577 = vcmp.ge.f32.partialorder %v481, 0.0
        %vm578 = vcmp.ge.f32.partialorder %v484, 0.0
        %vm579 = vcmp.ge.f32.partialorder %v489, 0.0
        %vm580 = vcmp.ge.f32.partialorder %v492, 0.0
        %vm581 = vcmp.ge.f32.partialorder %v497, 0.0
        %vm582 = vcmp.ge.f32.partialorder %v500, 0.0
        %vm583 = vcmp.ge.f32.partialorder %v505, 0.0
        %vm584 = vcmp.ge.f32.partialorder %v508, 0.0
        %vm585 = vcmp.ge.f32.partialorder %v513, 0.0
        %vm586 = vcmp.ge.f32.partialorder %v516, 0.0
        %vm587 = vcmp.ge.f32.partialorder %v521, 0.0
        %vm588 = vcmp.ge.f32.partialorder %v524, 0.0
        %vm589 = vcmp.ge.f32.partialorder %v529, 0.0
        %vm590 = vcmp.ge.f32.partialorder %v532, 0.0
        %vm591 = vcmp.ge.f32.partialorder %v537, 0.0
        %vm592 = vcmp.ge.f32.partialorder %v540, 0.0
        %vm593 = vcmp.ge.f32.partialorder %v545, 0.0
        %vm594 = vcmp.ge.f32.partialorder %v548, 0.0
        %vm595 = vcmp.ge.f32.partialorder %v553, 0.0
        %vm596 = vcmp.ge.f32.partialorder %v556, 0.0
        %vm597 = vcmp.ge.f32.partialorder %v561, 0.0
        %vm598 = vcmp.ge.f32.partialorder %v564, 0.0
        %v599 = vmul.f32 %v441, 0.2
        %v600 = vmul.f32 %v444, 0.2
        %v601 = vmul.f32 %v449, 0.2
        %v602 = vmul.f32 %v452, 0.2
        %v603 = vmul.f32 %v457, 0.2
        %v604 = vmul.f32 %v460, 0.2
        %v605 = vmul.f32 %v465, 0.2
        %v606 = vmul.f32 %v468, 0.2
        %v607 = vmul.f32 %v473, 0.2
        %v608 = vmul.f32 %v476, 0.2
        %v609 = vmul.f32 %v481, 0.2
        %v610 = vmul.f32 %v484, 0.2
        %v611 = vmul.f32 %v489, 0.2
        %v612 = vmul.f32 %v492, 0.2
        %v613 = vmul.f32 %v497, 0.2
        %v614 = vmul.f32 %v500, 0.2
        %v615 = vmul.f32 %v505, 0.2
        %v616 = vmul.f32 %v508, 0.2
        %v617 = vmul.f32 %v513, 0.2
        %v618 = vmul.f32 %v516, 0.2
        %v619 = vmul.f32 %v521, 0.2
        %v620 = vmul.f32 %v524, 0.2
        %v621 = vmul.f32 %v529, 0.2
        %v622 = vmul.f32 %v532, 0.2
        %v623 = vmul.f32 %v537, 0.2
        %v624 = vmul.f32 %v540, 0.2
        %v625 = vmul.f32 %v545, 0.2
        %v626 = vmul.f32 %v548, 0.2
        %v627 = vmul.f32 %v553, 0.2
        %v628 = vmul.f32 %v556, 0.2
        %v629 = vmul.f32 %v561, 0.2
        %v630 = vmul.f32 %v564, 0.2
        %v631 = vsel %vm567, %v441, %v599
        %v632 = vsel %vm568, %v444, %v600
        %v633 = vsel %vm569, %v449, %v601
        %v634 = vsel %vm570, %v452, %v602
        %v635 = vsel %vm571, %v457, %v603
        %v636 = vsel %vm572, %v460, %v604
        %v637 = vsel %vm573, %v465, %v605
        %v638 = vsel %vm574, %v468, %v606
        %v639 = vsel %vm575, %v473, %v607
        %v640 = vsel %vm576, %v476, %v608
        %v641 = vsel %vm577, %v481, %v609
        %v642 = vsel %vm578, %v484, %v610
        %v643 = vsel %vm579, %v489, %v611
        %v644 = vsel %vm580, %v492, %v612
        %v645 = vsel %vm581, %v497, %v613
        %v646 = vsel %vm582, %v500, %v614
        %v647 = vsel %vm583, %v505, %v615
        %v648 = vsel %vm584, %v508, %v616
        %v649 = vsel %vm585, %v513, %v617
        %v650 = vsel %vm586, %v516, %v618
        %v651 = vsel %vm587, %v521, %v619
        %v652 = vsel %vm588, %v524, %v620
        %v653 = vsel %vm589, %v529, %v621
        %v654 = vsel %vm590, %v532, %v622
        %v655 = vsel %vm591, %v537, %v623
        %v656 = vsel %vm592, %v540, %v624
        %v657 = vsel %vm593, %v545, %v625
        %v658 = vsel %vm594, %v548, %v626
        %v659 = vsel %vm595, %v553, %v627
        %v660 = vsel %vm596, %v556, %v628
        %v661 = vsel %vm597, %v561, %v629
        %v662 = vsel %vm598, %v564, %v630
        %663 = vst [vmem:[%s203] sm:$0xff] %v631
        %664 = vst [vmem:[%s203 + $0x8] sm:$0xff] %v632
        %665 = vst [vmem:[%s203 + $0x10] sm:$0xff] %v633
        %666 = vst [vmem:[%s203 + $0x18] sm:$0xff] %v634
        %667 = vst [vmem:[%s203 + $0x20] sm:$0xff] %v635
        %668 = vst [vmem:[%s203 + $0x28] sm:$0xff] %v636
        %669 = vst [vmem:[%s203 + $0x30] sm:$0xff] %v637
        %670 = vst [vmem:[%s203 + $0x38] sm:$0xff] %v638
        %671 = vst [vmem:[%s203 + $0x40] sm:$0xff] %v639
        %672 = vst [vmem:[%s203 + $0x48] sm:$0xff] %v640
        %673 = vst [vmem:[%s203 + $0x50] sm:$0xff] %v641
        %674 = vst [vmem:[%s203 + $0x58] sm:$0xff] %v642
        %675 = vst [vmem:[%s203 + $0x60] sm:$0xff] %v643
        %676 = vst [vmem:[%s203 + $0x68] sm:$0xff] %v644
        %677 = vst [vmem:[%s203 + $0x70] sm:$0xff] %v645
        %678 = vst [vmem:[%s203 + $0x78] sm:$0xff] %v646
        %679 = vst [vmem:[%s203 + $0x80] sm:$0xff] %v647
        %680 = vst [vmem:[%s203 + $0x88] sm:$0xff] %v648
        %681 = vst [vmem:[%s203 + $0x90] sm:$0xff] %v649
        %682 = vst [vmem:[%s203 + $0x98] sm:$0xff] %v650
        %683 = vst [vmem:[%s203 + $0xa0] sm:$0xff] %v651
        %684 = vst [vmem:[%s203 + $0xa8] sm:$0xff] %v652
        %685 = vst [vmem:[%s203 + $0xb0] sm:$0xff] %v653
        %686 = vst [vmem:[%s203 + $0xb8] sm:$0xff] %v654
        %687 = vst [vmem:[%s203 + $0xc0] sm:$0xff] %v655
        %688 = vst [vmem:[%s203 + $0xc8] sm:$0xff] %v656
        %689 = vst [vmem:[%s203 + $0xd0] sm:$0xff] %v657
        %690 = vst [vmem:[%s203 + $0xd8] sm:$0xff] %v658
        %691 = vst [vmem:[%s203 + $0xe0] sm:$0xff] %v659
        %692 = vst [vmem:[%s203 + $0xe8] sm:$0xff] %v660
        %693 = vst [vmem:[%s203 + $0xf0] sm:$0xff] %v661
        %694 = vst [vmem:[%s203 + $0xf8] sm:$0xff] %v662
        %s695 = sand.u32 %s97, 1
        %s696 = scalar_lea.sflag [#allocation4], %s695
        %s697 = sand.u32 %s97, 1
        %s698 = smul.addr %s697, 256
        %s699 = scalar_lea.vmem [#allocation7], %s698
        // Predicated region
        $region41: #{tpu_custom_call.1} parent=31 // pred_check
          %p700 = pneg %p107
        $region42: #{tpu_custom_call.1} parent=31 // pred_check_branch
          %702 = sbr.rel (%p700) target = $region44
        $region43: #{tpu_custom_call.1} parent=31 // pred_region
          %s703 = smul.u32 32, %s21
          %s705 = ssub.s32 4096, 4096
          %706 = vsyncadd %s696, %s705
          %s707 = smul.addr %s703, 128
          %s708 = scalar_lea.hbm %s3, %s707
          %s709 = sshll.u32 %s699, 4
          %s710 = int_to_ptr.vmem [resolvable:$true] %s709
          %715 = dma.vmem_to_hbm [thread:$0]  %s710, 4096, %s708, %s696, 128, 128, 8
        $region44: #{tpu_custom_call.1} parent=31 // pred_fallthru
          _
      $region32: #{tpu_custom_call.1} parent=5 // pred_fallthru
        _
      %p716 = scmp.le.s32.totalorder 2, %s16
      // Predicated region
      $region45: #{tpu_custom_call.1} parent=5 // pred_check
        %p717 = pneg %p716
      $region46: #{tpu_custom_call.1} parent=5 // pred_check_branch
        %719 = sbr.rel (%p717) target = $region48
      $region47: #{tpu_custom_call.1} parent=5 // pred_region
        %s720 = ssub.s32 %s16, 2
        // Predicated region
        $region49: #{tpu_custom_call.1} parent=47 // pred_check
          %p721 = pneg %p113
        $region50: #{tpu_custom_call.1} parent=47 // pred_check_branch
          %723 = sbr.rel (%p721) target = $region52
        $region51: #{tpu_custom_call.1} parent=47 // pred_region
          %s724 = sand.u32 %s98, 1
          %s725 = scalar_lea.sflag [#allocation4], %s724
          %s726 = sand.u32 %s98, 1
          %s727 = smul.addr %s726, 256
          %s728 = scalar_lea.vmem [#allocation7], %s727
          %729 = dma.done %s725, 4096
        $region52: #{tpu_custom_call.1} parent=47 // pred_fallthru
          _
      $region48: #{tpu_custom_call.1} parent=5 // pred_fallthru
        _
    $region6: #{tpu_custom_call.1} parent=1 // loop_footer
      %s20 = sadd.s32 1, %s16
    $region7: #{tpu_custom_call.1} parent=1 // loop_footer_branch
      %15 = sbr.rel target = $region3
    $region8: #{tpu_custom_call.1} parent=1 // loop_exit
      _
    %730 = vsyncpa [#allocation3], 1
    %s731 = scalar_lea.sflag [#allocation3], 1
    %732 = vsyncpa %s731, 1
    %733 = vsyncpa [#allocation6], 1
    %734 = vsyncpa [#allocation4], 1
    %s735 = scalar_lea.sflag [#allocation4], 1
    %736 = vsyncpa %s735, 1

</llo_original>
